<compile_context>
chip_gen: v5e
topology: v5e:2x2
jax: 0.10.0
libtpu: 0.0.40
codegen_flags: <defaults>
</compile_context>

<pallas_src>
import jax
import jax.numpy as jnp
from jax.experimental import pallas as pl
from jax.experimental.pallas import tpu as pltpu


def _mlp_kernel(x_ref, w2_ref, b2_ref, w3_ref, b3_ref, o_ref):
    # fc2: [TB, F] @ [F, Hp] + [1, Hp]   (MXU, f32 accumulate)
    h = jnp.dot(x_ref[...], w2_ref[...], preferred_element_type=jnp.float32)
    h = jnp.maximum(h + b2_ref[...], 0.0)          # bias + ReLU on the VPU
    # fc3: [TB, Hp] @ [Hp, Kp] + [1, Kp]  (lane-dense, unmasked store)
    out = jnp.dot(h, w3_ref[...], preferred_element_type=jnp.float32)
    o_ref[...] = (out + b3_ref[...]).astype(o_ref.dtype)


def _round_up(n, m):
    return ((n + m - 1) // m) * m


def net_forward(x, w2, b2, w3, b3, *, block_b=512):
    """Forward pass of Net.

    x:  [B, F] float32
    w2: [F, H]  (fc2.weight transposed), b2: [1, H]
    w3: [H, K]  (fc3.weight transposed), b3: [1, K]
    returns [B, K] float32
    """
    B, F = x.shape
    H = w2.shape[1]
    K = w3.shape[1]
    assert w2.shape == (F, H) and b2.shape == (1, H)
    assert w3.shape == (H, K) and b3.shape == (1, K)

    # Pad the narrow hidden/output dims to the 128-lane vreg width so the
    # matmuls and the final store are lane-dense (padded cols are exact zeros).
    HP = _round_up(H, 128)
    KP = _round_up(K, 128)
    w2p = jnp.pad(w2, ((0, 0), (0, HP - H))).astype(jnp.float32)
    b2p = jnp.pad(b2, ((0, 0), (0, HP - H))).astype(jnp.float32)
    w3p = jnp.pad(w3, ((0, HP - H), (0, KP - K))).astype(jnp.float32)
    b3p = jnp.pad(b3, ((0, 0), (0, KP - K))).astype(jnp.float32)

    # Batch tiling: big tiles to amortize per-step overhead, but never larger
    # than the (sublane-rounded) batch itself.
    bb = min(block_b, _round_up(B, 8))
    BP = _round_up(B, bb)
    xp = x.astype(jnp.float32)
    if BP != B:
        xp = jnp.pad(xp, ((0, BP - B), (0, 0)))

    grid = (BP // bb,)

    out_padded = pl.pallas_call(
        _mlp_kernel,
        out_shape=jax.ShapeDtypeStruct((BP, KP), jnp.float32),
        grid=grid,
        in_specs=[
            pl.BlockSpec((bb, F), lambda i: (i, 0)),     # x tile, pipelined
            pl.BlockSpec((F, HP), lambda i: (0, 0)),     # resident weights
            pl.BlockSpec((1, HP), lambda i: (0, 0)),
            pl.BlockSpec((HP, KP), lambda i: (0, 0)),
            pl.BlockSpec((1, KP), lambda i: (0, 0)),
        ],
        out_specs=pl.BlockSpec((bb, KP), lambda i: (i, 0)),
        compiler_params=pltpu.CompilerParams(
            dimension_semantics=("parallel",),           # 2 TCs on v7x
        ),
    )(xp, w2p, b2p, w3p, b3p)

    return out_padded[:B, :K]


if __name__ == "__main__":
    # Shapes implied by the module: num_input_parameters=16, hidden=10 (fixed),
    # num_objectives=2, small batch of 8.
    B, F, H, K = 8, 16, 10, 2

    key = jax.random.PRNGKey(0)
    kx, kw2, kb2, kw3, kb3 = jax.random.split(key, 5)

    x = jax.random.normal(kx, (B, F), dtype=jnp.float32)
    # torch.nn.init.normal_ -> standard-normal weights/biases (deterministic here)
    w2 = jax.random.normal(kw2, (F, H), dtype=jnp.float32)   # fc2.weight^T
    b2 = jax.random.normal(kb2, (1, H), dtype=jnp.float32)   # fc2.bias
    w3 = jax.random.normal(kw3, (H, K), dtype=jnp.float32)   # fc3.weight^T
    b3 = jax.random.normal(kb3, (1, K), dtype=jnp.float32)   # fc3.bias

    # Small-shape run (matches the module's typical usage).
    out = net_forward(x, w2, b2, w3, b3)
    jax.block_until_ready(out)
    ref = jnp.maximum(x @ w2 + b2, 0.0) @ w3 + b3
    assert out.shape == (B, K)
    assert jnp.allclose(out, ref, atol=1e-5, rtol=1e-5)

    # Larger batch exercises the multi-tile grid / pipelining path
    # (including a non-multiple-of-tile batch so the pad/slice path is hit).
    B2 = 1000
    x2 = jax.random.normal(jax.random.PRNGKey(1), (B2, F), dtype=jnp.float32)
    out2 = net_forward(x2, w2, b2, w3, b3, block_b=512)
    jax.block_until_ready(out2)
    ref2 = jnp.maximum(x2 @ w2 + b2, 0.0) @ w3 + b3
    assert out2.shape == (B2, K)
    assert jnp.allclose(out2, ref2, atol=1e-4, rtol=1e-5)

    print("KERNEL_OK")
</pallas_src>

<mosaic_0001>
module attributes {stable_mosaic.version = 11 : i64} {
  func.func @_mlp_kernel(%arg0: i32, %arg1: memref<8x16xf32, #tpu.memory_space<vmem>>, %arg2: memref<16x128xf32, #tpu.memory_space<vmem>>, %arg3: memref<1x128xf32, #tpu.memory_space<vmem>>, %arg4: memref<128x128xf32, #tpu.memory_space<vmem>>, %arg5: memref<1x128xf32, #tpu.memory_space<vmem>>, %arg6: memref<8x128xf32, #tpu.memory_space<vmem>>) attributes {dimension_semantics = [#tpu.dimension_semantics<parallel>], iteration_bounds = array<i64: 1>, scalar_prefetch = 0 : i64, scratch_operands = 0 : i64, tpu.core_type = #tpu.core_type<tc>, window_params = [{transform_indices = @transform_0, window_bounds = array<i64: 8, 16>}, {pipeline_mode = #tpu.pipeline_mode<synchronous>, transform_indices = @transform_1, window_bounds = array<i64: 16, 128>}, {pipeline_mode = #tpu.pipeline_mode<synchronous>, transform_indices = @transform_2, window_bounds = array<i64: 1, 128>}, {pipeline_mode = #tpu.pipeline_mode<synchronous>, transform_indices = @transform_3, window_bounds = array<i64: 128, 128>}, {pipeline_mode = #tpu.pipeline_mode<synchronous>, transform_indices = @transform_4, window_bounds = array<i64: 1, 128>}, {transform_indices = @transform_5, window_bounds = array<i64: 8, 128>}]} {
    %c0 = arith.constant 0 : index
    %c0_0 = arith.constant 0 : index
    %0 = vector.load %arg1[%c0, %c0_0] : memref<8x16xf32, #tpu.memory_space<vmem>>, vector<8x16xf32>
    %c0_1 = arith.constant 0 : index
    %c0_2 = arith.constant 0 : index
    %1 = vector.load %arg2[%c0_1, %c0_2] : memref<16x128xf32, #tpu.memory_space<vmem>>, vector<16x128xf32>
    %cst = arith.constant dense<0.000000e+00> : vector<8x128xf32>
    %2 = tpu.matmul %0, %1, %cst {dimension_numbers = #tpu.dot_dimension_numbers<[1], [0], [0], [1], [0, 0, 1, 1], [], []>} : vector<8x16xf32>, vector<16x128xf32>, vector<8x128xf32> -> vector<8x128xf32>
    %c0_3 = arith.constant 0 : index
    %c0_4 = arith.constant 0 : index
    %3 = vector.load %arg3[%c0_3, %c0_4] : memref<1x128xf32, #tpu.memory_space<vmem>>, vector<1x128xf32>
    %4 = vector.broadcast %3 : vector<1x128xf32> to vector<8x128xf32>
    %5 = arith.addf %2, %4 : vector<8x128xf32>
    %cst_5 = arith.constant 0.000000e+00 : f32
    %6 = vector.broadcast %cst_5 : f32 to vector<8x128xf32>
    %7 = arith.maximumf %5, %6 : vector<8x128xf32>
    %c0_6 = arith.constant 0 : index
    %c0_7 = arith.constant 0 : index
    %8 = vector.load %arg4[%c0_6, %c0_7] : memref<128x128xf32, #tpu.memory_space<vmem>>, vector<128x128xf32>
    %cst_8 = arith.constant dense<0.000000e+00> : vector<8x128xf32>
    %9 = tpu.matmul %7, %8, %cst_8 {dimension_numbers = #tpu.dot_dimension_numbers<[1], [0], [0], [1], [0, 0, 1, 1], [], []>} : vector<8x128xf32>, vector<128x128xf32>, vector<8x128xf32> -> vector<8x128xf32>
    %c0_9 = arith.constant 0 : index
    %c0_10 = arith.constant 0 : index
    %10 = vector.load %arg5[%c0_9, %c0_10] : memref<1x128xf32, #tpu.memory_space<vmem>>, vector<1x128xf32>
    %11 = vector.broadcast %10 : vector<1x128xf32> to vector<8x128xf32>
    %12 = arith.addf %9, %11 : vector<8x128xf32>
    %c0_11 = arith.constant 0 : index
    %c0_12 = arith.constant 0 : index
    %13 = vector.load %arg6[%c0_11, %c0_12] : memref<8x128xf32, #tpu.memory_space<vmem>>, vector<8x128xf32>
    tpu.vector_store %arg6[%c0_11, %c0_12], %12 {strides = array<i32>} : memref<8x128xf32, #tpu.memory_space<vmem>>, vector<8x128xf32>,
    return
  }
  func.func @transform_0(%arg0: i32) -> (i32, i32) {
    %c0_i32 = arith.constant 0 : i32
    %c0_i32_0 = arith.constant 0 : i32
    return %arg0, %c0_i32 : i32, i32
  }
  func.func @transform_1(%arg0: i32) -> (i32, i32) {
    %c0_i32 = arith.constant 0 : i32
    %c0_i32_0 = arith.constant 0 : i32
    %c0_i32_1 = arith.constant 0 : i32
    return %c0_i32, %c0_i32_0 : i32, i32
  }
  func.func @transform_2(%arg0: i32) -> (i32, i32) {
    %c0_i32 = arith.constant 0 : i32
    %c0_i32_0 = arith.constant 0 : i32
    %c0_i32_1 = arith.constant 0 : i32
    return %c0_i32, %c0_i32_0 : i32, i32
  }
  func.func @transform_3(%arg0: i32) -> (i32, i32) {
    %c0_i32 = arith.constant 0 : i32
    %c0_i32_0 = arith.constant 0 : i32
    %c0_i32_1 = arith.constant 0 : i32
    return %c0_i32, %c0_i32_0 : i32, i32
  }
  func.func @transform_4(%arg0: i32) -> (i32, i32) {
    %c0_i32 = arith.constant 0 : i32
    %c0_i32_0 = arith.constant 0 : i32
    %c0_i32_1 = arith.constant 0 : i32
    return %c0_i32, %c0_i32_0 : i32, i32
  }
  func.func @transform_5(%arg0: i32) -> (i32, i32) {
    %c0_i32 = arith.constant 0 : i32
    %c0_i32_0 = arith.constant 0 : i32
    return %arg0, %c0_i32 : i32, i32
  }
}

</mosaic_0001>

<llo_original>
// kernel: tpu_custom_call.1
$region0: #{tpu_custom_call.1}
  #allocation0 [shape = 'u32[]', space=smem, size = 0x4, offset = 0x4, fixed_abs, tag = 'smem constant byte address 0x4 - core index']
  #allocation1 [shape = 'u32[72,128]{1,0:T(1,128)}', space=vmem, size = 0x9000, scoped, tag = 'internal scratch']
  %s0 = inlined_call_operand.hbm [shape: f32[8,16], index: 0, kind: input, shape index: {}]
  %s1 = inlined_call_operand.hbm [shape: f32[16,128], index: 1, kind: input, shape index: {}]
  %s2 = inlined_call_operand.vmem [shape: f32[1,128], index: 2, kind: input, shape index: {}]
  %s3 = inlined_call_operand.hbm [shape: f32[128,128], index: 3, kind: input, shape index: {}]
  %s4 = inlined_call_operand.vmem [shape: f32[1,128], index: 4, kind: input, shape index: {}]
  %s5 = inlined_call_operand.hbm [shape: f32[8,128], index: 5, kind: output, shape index: {}]
  %s6 = sld [smem:[#allocation0]]
  $region42: #{tpu_custom_call.1} parent=0
    _
  %s8 = ssub.s32 1, %s6
  %s9 = scalar_select 0, %s8, %s6
  $region1: #{tpu_custom_call.1} parent=0
    #allocation2 [shape = 'u8[4096]{0}', space=vmem, size = 0x1000, scoped, tag = 'input window, operand 0, single buffered']
    #allocation3 [shape = 's32[1]{0}', space=sflag, size = 0x4, scoped, tag = 'scoped memory for tpu_custom_call.1']
    #allocation4 [shape = 's32[1]{0}', space=sflag, size = 0x4, scoped, tag = 'scoped memory for tpu_custom_call.1']
    #allocation5 [shape = 'u8[8192]{0}', space=vmem, size = 0x2000, scoped, tag = 'input window, operand 1, single buffered']
    #allocation6 [shape = 's32[1]{0}', space=sflag, size = 0x4, scoped, tag = 'scoped memory for tpu_custom_call.1']
    #allocation7 [shape = 'u8[65536]{0}', space=vmem, size = 0x10000, scoped, tag = 'input window, operand 3, single buffered']
    #allocation8 [shape = 'u8[4096]{0}', space=vmem, size = 0x1000, scoped, tag = 'output window, operand 0, single buffered']
    %10 = vsyncpa [#allocation3], 0
    %11 = vsyncpa [#allocation6], 0
    %12 = vsyncpa [#allocation4], 0
    // Predicated region
    $region2: #{tpu_custom_call.1} parent=1 // pred_check
      _
    $region3: #{tpu_custom_call.1} parent=1 // pred_check_branch
      %14 = sbr.rel (0) target = $region5
    $region4: #{tpu_custom_call.1} parent=1 // pred_region
      %16 = vsyncadd [#allocation3], 0
      %s18 = sshll.u32 %s0, 4
      %s19 = int_to_ptr.hbm [resolvable:$true] %s18
      %s20 = sshll.u32 [#allocation2], 4
      %s21 = int_to_ptr.vmem [resolvable:$true] %s20
      %23 = dma.hbm_to_vmem [thread:$0]  %s19, 128, %s21, [#allocation3]
    $region5: #{tpu_custom_call.1} parent=1 // pred_fallthru
      _
    // Predicated region
    $region6: #{tpu_custom_call.1} parent=1 // pred_check
      _
    $region7: #{tpu_custom_call.1} parent=1 // pred_check_branch
      %25 = sbr.rel (0) target = $region9
    $region8: #{tpu_custom_call.1} parent=1 // pred_region
      %27 = vsyncadd [#allocation6], 0
      %s28 = sshll.u32 %s1, 4
      %s29 = int_to_ptr.hbm [resolvable:$true] %s28
      %s30 = sshll.u32 [#allocation5], 4
      %s31 = int_to_ptr.vmem [resolvable:$true] %s30
      %36 = dma.hbm_to_vmem [thread:$0]  %s29, 256, %s31, [#allocation6], 128, 128, 8
    $region9: #{tpu_custom_call.1} parent=1 // pred_fallthru
      _
    // Predicated region
    $region10: #{tpu_custom_call.1} parent=1 // pred_check
      _
    $region11: #{tpu_custom_call.1} parent=1 // pred_check_branch
      %38 = sbr.rel (0) target = $region13
    $region12: #{tpu_custom_call.1} parent=1 // pred_region
      _
    $region13: #{tpu_custom_call.1} parent=1 // pred_fallthru
      _
    // Predicated region
    $region14: #{tpu_custom_call.1} parent=1 // pred_check
      _
    $region15: #{tpu_custom_call.1} parent=1 // pred_check_branch
      %40 = sbr.rel (0) target = $region17
    $region16: #{tpu_custom_call.1} parent=1 // pred_region
      %42 = vsyncadd [#allocation6], 0
      %s43 = sshll.u32 %s3, 4
      %s44 = int_to_ptr.hbm [resolvable:$true] %s43
      %s45 = sshll.u32 [#allocation7], 4
      %s46 = int_to_ptr.vmem [resolvable:$true] %s45
      %51 = dma.hbm_to_vmem [thread:$0]  %s44, 2048, %s46, [#allocation6], 128, 128, 8
    $region17: #{tpu_custom_call.1} parent=1 // pred_fallthru
      _
    // Predicated region
    $region18: #{tpu_custom_call.1} parent=1 // pred_check
      _
    $region19: #{tpu_custom_call.1} parent=1 // pred_check_branch
      %53 = sbr.rel (0) target = $region21
    $region20: #{tpu_custom_call.1} parent=1 // pred_region
      _
    $region21: #{tpu_custom_call.1} parent=1 // pred_fallthru
      _
    // Predicated region
    $region22: #{tpu_custom_call.1} parent=1 // pred_check
      _
    $region23: #{tpu_custom_call.1} parent=1 // pred_check_branch
      %55 = sbr.rel (0) target = $region25
    $region24: #{tpu_custom_call.1} parent=1 // pred_region
      %57 = dma.done [#allocation3], 128
    $region25: #{tpu_custom_call.1} parent=1 // pred_fallthru
      _
    // Predicated region
    $region26: #{tpu_custom_call.1} parent=1 // pred_check
      _
    $region27: #{tpu_custom_call.1} parent=1 // pred_check_branch
      %59 = sbr.rel (0) target = $region29
    $region28: #{tpu_custom_call.1} parent=1 // pred_region
      %61 = dma.done [#allocation6], 256
    $region29: #{tpu_custom_call.1} parent=1 // pred_fallthru
      _
    // Predicated region
    $region30: #{tpu_custom_call.1} parent=1 // pred_check
      _
    $region31: #{tpu_custom_call.1} parent=1 // pred_check_branch
      %63 = sbr.rel (0) target = $region33
    $region32: #{tpu_custom_call.1} parent=1 // pred_region
      %65 = dma.done [#allocation6], 2048
    $region33: #{tpu_custom_call.1} parent=1 // pred_fallthru
      _
    %v66 = vld [vmem:[#allocation2] sm:$0xff]
    %v67 = vld [vmem:[#allocation5] sm:$0xff]
    %v68 = vld [vmem:[#allocation5 + $0x8] sm:$0xff]
    %v69 = vld [vmem:[%s2] sm:$0x1]
    %v71 = vperm.slane %v69, 0
    %vm73 = vcmask 130048
    %v75 = vsel %vm73, %v66, 0
    %77 = vmatpush.msra.mxu0 0.0
    %78 = vmatpush.msra.mxu0 0.0
    %79 = vmatpush.msra.mxu0 0.0
    %80 = vmatpush.msra.mxu0 0.0
    %81 = vmatpush.msra.mxu0 0.0
    %82 = vmatpush.msra.mxu0 0.0
    %83 = vmatpush.msra.mxu0 0.0
    %84 = vmatpush.msra.mxu0 0.0
    %85 = vmatpush.msra.mxu0 0.0
    %86 = vmatpush.msra.mxu0 0.0
    %87 = vmatpush.msra.mxu0 0.0
    %88 = vmatpush.msra.mxu0 0.0
    %89 = vmatpush.msra.mxu0 0.0
    %90 = vmatpush.msra.mxu0 0.0
    %91 = vmatpush.msra.mxu0 %v68
    %92 = vmatpush.msra.mxu0 %v67
    %93 = vmatmul.f32.gmra.mxu0 %v75
    %v94 = vpop.f32.mrf.mxu0
    %v95 = vadd.f32 %v71, %v94
    %96 = vdwg.mxu0
    %v97 = vmax.f32 %v95, 0.0
    %v98 = vld [vmem:[#allocation7] sm:$0xff]
    %v99 = vld [vmem:[#allocation7 + $0x8] sm:$0xff]
    %v100 = vld [vmem:[#allocation7 + $0x10] sm:$0xff]
    %v101 = vld [vmem:[#allocation7 + $0x18] sm:$0xff]
    %v102 = vld [vmem:[#allocation7 + $0x20] sm:$0xff]
    %v103 = vld [vmem:[#allocation7 + $0x28] sm:$0xff]
    %v104 = vld [vmem:[#allocation7 + $0x30] sm:$0xff]
    %v105 = vld [vmem:[#allocation7 + $0x38] sm:$0xff]
    %v106 = vld [vmem:[#allocation7 + $0x40] sm:$0xff]
    %v107 = vld [vmem:[#allocation7 + $0x48] sm:$0xff]
    %v108 = vld [vmem:[#allocation7 + $0x50] sm:$0xff]
    %v109 = vld [vmem:[#allocation7 + $0x58] sm:$0xff]
    %v110 = vld [vmem:[#allocation7 + $0x60] sm:$0xff]
    %v111 = vld [vmem:[#allocation7 + $0x68] sm:$0xff]
    %v112 = vld [vmem:[#allocation7 + $0x70] sm:$0xff]
    %v113 = vld [vmem:[#allocation7 + $0x78] sm:$0xff]
    %v114 = vld [vmem:[%s4] sm:$0x1]
    %v116 = vperm.slane %v114, 0
    %118 = vmatpush.msra.mxu0 %v113
    %119 = vmatpush.msra.mxu0 %v112
    %120 = vmatpush.msra.mxu0 %v111
    %121 = vmatpush.msra.mxu0 %v110
    %122 = vmatpush.msra.mxu0 %v109
    %123 = vmatpush.msra.mxu0 %v108
    %124 = vmatpush.msra.mxu0 %v107
    %125 = vmatpush.msra.mxu0 %v106
    %126 = vmatpush.msra.mxu0 %v105
    %127 = vmatpush.msra.mxu0 %v104
    %128 = vmatpush.msra.mxu0 %v103
    %129 = vmatpush.msra.mxu0 %v102
    %130 = vmatpush.msra.mxu0 %v101
    %131 = vmatpush.msra.mxu0 %v100
    %132 = vmatpush.msra.mxu0 %v99
    %133 = vmatpush.msra.mxu0 %v98
    %134 = vmatmul.f32.gmra.mxu0 %v97
    %v135 = vpop.f32.mrf.mxu0
    %v136 = vadd.f32 %v116, %v135
    %137 = vdwg.mxu0
    %138 = vst [vmem:[#allocation8] sm:$0xff] %v136
    // Predicated region
    $region34: #{tpu_custom_call.1} parent=1 // pred_check
      _
    $region35: #{tpu_custom_call.1} parent=1 // pred_check_branch
      %140 = sbr.rel (0) target = $region37
    $region36: #{tpu_custom_call.1} parent=1 // pred_region
      %142 = vsyncadd [#allocation4], 0
      %s144 = sshll.u32 [#allocation8], 4
      %s145 = int_to_ptr.vmem [resolvable:$true] %s144
      %s146 = sshll.u32 %s5, 4
      %s147 = int_to_ptr.hbm [resolvable:$true] %s146
      %149 = dma.vmem_to_hbm [thread:$0]  %s145, 128, %s147, [#allocation4]
    $region37: #{tpu_custom_call.1} parent=1 // pred_fallthru
      _
    // Predicated region
    $region38: #{tpu_custom_call.1} parent=1 // pred_check
      _
    $region39: #{tpu_custom_call.1} parent=1 // pred_check_branch
      %151 = sbr.rel (0) target = $region41
    $region40: #{tpu_custom_call.1} parent=1 // pred_region
      %153 = dma.done [#allocation4], 128
    $region41: #{tpu_custom_call.1} parent=1 // pred_fallthru
      _
    %154 = vsyncpa [#allocation3], 1
    %155 = vsyncpa [#allocation6], 1
    %156 = vsyncpa [#allocation4], 1

</llo_original>
